<compile_context>
chip_gen: v5e
topology: v5e:2x2
jax: 0.10.0
libtpu: 0.0.40
codegen_flags: <defaults>
</compile_context>

<pallas_src>
import math

import jax
import jax.numpy as jnp
from jax.experimental import pallas as pl
from jax.experimental.pallas import tpu as pltpu

_LANE = 128
_TILE_BYTES = 4 * 1024 * 1024        # per-block byte budget (input or output block)
_VMEM_LIMIT = 40 * 1024 * 1024       # scoped VMEM; < v7x's 64 MiB physical VMEM


def _sublane_unit(dtype):
    # f32 -> 8, bf16/f16 -> 16, int8/fp8 -> 32 (sub-32-bit packs along sublanes).
    return max(8, 32 // max(1, jnp.dtype(dtype).itemsize))


def _round_up(x, m):
    return -(-x // m) * m


def _divisors(x):
    small, large = [], []
    i = 1
    while i * i <= x:
        if x % i == 0:
            small.append(i)
            if i != x // i:
                large.append(x // i)
        i += 1
    return small + large[::-1]


def _pick_tile(dim, unit, cap):
    """Largest divisor t of dim with t % unit == 0 and t <= cap; full dim if
    dim is not a multiple of unit (keeps the BlockSpec legal)."""
    if dim % unit != 0:
        return dim
    limit = min(dim, max(unit, cap))
    best = unit
    for t in _divisors(dim):
        if t % unit == 0 and best < t <= limit:
            best = t
    return best


def _make_kernel(tm, sp, compute_dtype):
    """Kernel: o = x * s, with s either a (1, TN) row, a full (TM, TN) block,
    or a (sp, TN) period broadcast over TM // sp row groups."""

    def kernel(x_ref, s_ref, o_ref):
        x = x_ref[...].astype(compute_dtype)
        s = s_ref[...].astype(compute_dtype)
        if sp == 1 or sp == tm:
            y = x * s
        else:
            tn = x.shape[-1]
            y = (x.reshape(tm // sp, sp, tn) * s[None, :, :]).reshape(tm, tn)
        o_ref[...] = y.astype(o_ref.dtype)

    return kernel


def scale_forward(x, scale):
    """Computes x * scale with torch-style trailing-dim broadcasting of scale."""
    x = jnp.asarray(x)
    s_arr = jnp.asarray(scale)
    out_dtype = jnp.result_type(x.dtype, s_arr.dtype)

    # Degenerate cases: nothing useful for a kernel to do.
    if x.ndim == 0 or s_arr.ndim > x.ndim or x.size == 0:
        return (x * s_arr).astype(out_dtype)

    orig_shape = x.shape
    compute_dtype = jnp.float32 if jnp.issubdtype(out_dtype, jnp.floating) else out_dtype

    # ---- (rows, lanes) split: scale's dims (>=1) are the lane-side features;
    # absorb extra trailing batch dims while the lane width is < 128.
    split = x.ndim - max(s_arr.ndim, 1)
    while split > 0 and math.prod(orig_shape[split:]) < _LANE:
        split -= 1
    feat_shape = orig_shape[split:]
    n = int(math.prod(orig_shape[:split]))
    f = int(math.prod(feat_shape))

    s_feat = jnp.broadcast_to(s_arr, feat_shape).reshape(-1).astype(compute_dtype)

    unit = _sublane_unit(x.dtype)
    bs = max(jnp.dtype(x.dtype).itemsize, jnp.dtype(out_dtype).itemsize)

    # ---- small-batch fix-up: fold feature groups into the row axis so rows
    # fill whole sublane groups while lanes stay 128-aligned.
    g = 1
    if n % unit != 0:
        for d in _divisors(f):
            if d == 1:
                continue
            if ((n * d) % unit == 0 and (f // d) % _LANE == 0
                    and math.lcm(d, unit) * _LANE * bs <= _TILE_BYTES):
                g = d
                break

    if g > 1:
        lanes = f // g
        rows = n * g
        period = math.lcm(g, unit)            # sublane-aligned scale period
        x2 = x.reshape(rows, lanes)
        s2 = jnp.tile(s_feat.reshape(g, lanes), (period // g, 1))
        sp = period
        row_unit = period
        valid_rows, valid_lanes = rows, lanes
    else:
        lanes = f
        rows = n
        x2 = x.reshape(rows, lanes)
        s2 = s_feat.reshape(1, lanes)
        sp = 1
        row_unit = unit
        valid_rows, valid_lanes = rows, lanes
        # Lane padding -> unmasked stores and clean 128-lane tiling.
        lane_pad = _round_up(lanes, _LANE) - lanes
        if lane_pad:
            x2 = jnp.pad(x2, ((0, 0), (0, lane_pad)))
            s2 = jnp.pad(s2, ((0, 0), (0, lane_pad)))
            lanes += lane_pad
        # Row padding only when the batch is big enough for divisor tiling.
        if rows % unit != 0 and rows > unit:
            row_pad = _round_up(rows, unit) - rows
            x2 = jnp.pad(x2, ((0, row_pad), (0, 0)))
            rows += row_pad

    # ---- byte-budget-driven tile sizes.
    if row_unit * lanes * bs <= _TILE_BYTES:
        tn = lanes                              # full width: contiguous DMA slabs
    else:
        max_lanes = max(_LANE, _TILE_BYTES // (row_unit * bs))
        tn = _pick_tile(lanes, _LANE, max_lanes)

    max_rows = max(row_unit, _TILE_BYTES // (tn * bs))
    tm = _pick_tile(rows, row_unit, max_rows)

    # Give v7x's two TensorCores at least two parallel blocks on large inputs.
    if (rows // tm == 1 and lanes // tn == 1 and rows % row_unit == 0
            and rows >= 2 * row_unit and rows * lanes * bs >= (2 << 20)):
        tm2 = _pick_tile(rows, row_unit, max(row_unit, rows // 2))
        if tm2 < rows and rows // tm2 <= 8:
            tm = tm2

    grid = (rows // tm, lanes // tn)

    out2 = pl.pallas_call(
        _make_kernel(tm, sp, compute_dtype),
        out_shape=jax.ShapeDtypeStruct((rows, lanes), out_dtype),
        grid=grid,
        in_specs=[
            pl.BlockSpec((tm, tn), lambda i, j: (i, j)),
            pl.BlockSpec((sp, tn), lambda i, j: (0, j)),
        ],
        out_specs=pl.BlockSpec((tm, tn), lambda i, j: (i, j)),
        compiler_params=pltpu.CompilerParams(
            dimension_semantics=("parallel", "parallel"),
            vmem_limit_bytes=_VMEM_LIMIT,
        ),
    )(x2, s2)

    out2 = out2[:valid_rows, :valid_lanes]
    return out2.reshape(orig_shape)


class Scale:
    """JAX/Pallas port of the PyTorch Scale module: forward(x) = x * scale."""

    def __init__(self, in_dim=None, scale=None):
        assert in_dim is not None
        self.out_dim = in_dim if isinstance(in_dim, list) else [in_dim]
        if scale is not None:
            # Provided scale is used as-is (scalar or tensor), like the module.
            self.scale = jnp.asarray(scale)
        else:
            # nn.Parameter(torch.ones(in_dim)) equivalent.
            # TODO(synk): parameter training/grad handling not modeled; forward only.
            self.scale = jnp.ones(tuple(self.out_dim), dtype=jnp.float32)

    def __call__(self, x):
        return scale_forward(x, self.scale)


if __name__ == "__main__":
    key = jax.random.PRNGKey(0)
    kx, ks = jax.random.split(key)

    # Main case: N=2, C=4, H=16, W=16 with a full per-feature scale
    # (exercises the small-batch feature-folding layout).
    N, C, H, W = 2, 4, 16, 16
    x = jax.random.normal(kx, (N, C, H, W), dtype=jnp.float32)
    scale_param = jax.random.normal(ks, (C, H, W), dtype=jnp.float32)
    layer = Scale(in_dim=[C, H, W], scale=scale_param)
    out = jax.block_until_ready(layer(x))
    ref = x * scale_param[None]
    assert out.shape == x.shape and out.dtype == ref.dtype
    assert jnp.allclose(out, ref, atol=1e-6, rtol=1e-6)

    # Default-parameter path: scale = ones(in_dim) -> identity forward.
    layer_id = Scale(in_dim=[C, H, W])
    out_id = jax.block_until_ready(layer_id(x))
    assert jnp.allclose(out_id, x, atol=1e-6, rtol=1e-6)

    # Non-128-aligned feature width (exercises the lane-padding path).
    x3 = jax.random.normal(kx, (8, 5, 40), dtype=jnp.float32)
    s3 = jax.random.normal(ks, (5, 40), dtype=jnp.float32)
    out3 = jax.block_until_ready(Scale(in_dim=[5, 40], scale=s3)(x3))
    assert jnp.allclose(out3, x3 * s3[None], atol=1e-6, rtol=1e-6)

    print("KERNEL_OK")
</pallas_src>

<mosaic_0001>
module attributes {stable_mosaic.version = 11 : i64} {
  func.func @kernel(%arg0: i32, %arg1: i32, %arg2: memref<8x256xf32, #tpu.memory_space<vmem>>, %arg3: memref<8x256xf32, #tpu.memory_space<vmem>>, %arg4: memref<8x256xf32, #tpu.memory_space<vmem>>) attributes {dimension_semantics = [#tpu.dimension_semantics<parallel>, #tpu.dimension_semantics<parallel>], iteration_bounds = array<i64: 1, 1>, scalar_prefetch = 0 : i64, scratch_operands = 0 : i64, tpu.core_type = #tpu.core_type<tc>, window_params = [{transform_indices = @transform_0, window_bounds = array<i64: 8, 256>}, {transform_indices = @transform_1, window_bounds = array<i64: 8, 256>}, {transform_indices = @transform_2, window_bounds = array<i64: 8, 256>}]} {
    %c0 = arith.constant 0 : index
    %c0_0 = arith.constant 0 : index
    %0 = vector.load %arg2[%c0, %c0_0] : memref<8x256xf32, #tpu.memory_space<vmem>>, vector<8x256xf32>
    %c0_1 = arith.constant 0 : index
    %c0_2 = arith.constant 0 : index
    %1 = vector.load %arg3[%c0_1, %c0_2] : memref<8x256xf32, #tpu.memory_space<vmem>>, vector<8x256xf32>
    %2 = arith.mulf %0, %1 : vector<8x256xf32>
    %c0_3 = arith.constant 0 : index
    %c0_4 = arith.constant 0 : index
    %3 = vector.load %arg4[%c0_3, %c0_4] : memref<8x256xf32, #tpu.memory_space<vmem>>, vector<8x256xf32>
    tpu.vector_store %arg4[%c0_3, %c0_4], %2 {strides = array<i32>} : memref<8x256xf32, #tpu.memory_space<vmem>>, vector<8x256xf32>,
    return
  }
  func.func @transform_0(%arg0: i32, %arg1: i32) -> (i32, i32) {
    %c0_i32 = arith.constant 0 : i32
    return %arg0, %arg1 : i32, i32
  }
  func.func @transform_1(%arg0: i32, %arg1: i32) -> (i32, i32) {
    %c0_i32 = arith.constant 0 : i32
    %c0_i32_0 = arith.constant 0 : i32
    return %c0_i32, %arg1 : i32, i32
  }
  func.func @transform_2(%arg0: i32, %arg1: i32) -> (i32, i32) {
    %c0_i32 = arith.constant 0 : i32
    return %arg0, %arg1 : i32, i32
  }
}

</mosaic_0001>

<llo_original>
// kernel: tpu_custom_call.1
$region0: #{tpu_custom_call.1}
  #allocation0 [shape = 'u32[]', space=smem, size = 0x4, offset = 0x4, fixed_abs, tag = 'smem constant byte address 0x4 - core index']
  #allocation1 [shape = 'u32[72,128]{1,0:T(1,128)}', space=vmem, size = 0x9000, scoped, tag = 'internal scratch']
  %s0 = inlined_call_operand.hbm [shape: f32[8,256], index: 0, kind: input, shape index: {}]
  %s1 = inlined_call_operand.hbm [shape: f32[8,256], index: 1, kind: input, shape index: {}]
  %s2 = inlined_call_operand.hbm [shape: f32[8,256], index: 2, kind: output, shape index: {}]
  %s3 = sld [smem:[#allocation0]]
  $region26: #{tpu_custom_call.1} parent=0
    _
  %s5 = ssub.s32 1, %s3
  %s6 = scalar_select 0, %s5, %s3
  $region1: #{tpu_custom_call.1} parent=0
    #allocation2 [shape = 'u8[8192]{0}', space=vmem, size = 0x2000, scoped, tag = 'input window, operand 0, single buffered']
    #allocation3 [shape = 's32[1]{0}', space=sflag, size = 0x4, scoped, tag = 'scoped memory for tpu_custom_call.1']
    #allocation4 [shape = 's32[1]{0}', space=sflag, size = 0x4, scoped, tag = 'scoped memory for tpu_custom_call.1']
    #allocation5 [shape = 'u8[8192]{0}', space=vmem, size = 0x2000, scoped, tag = 'input window, operand 1, single buffered']
    #allocation6 [shape = 's32[1]{0}', space=sflag, size = 0x4, scoped, tag = 'scoped memory for tpu_custom_call.1']
    #allocation7 [shape = 'u8[8192]{0}', space=vmem, size = 0x2000, scoped, tag = 'output window, operand 0, single buffered']
    %7 = vsyncpa [#allocation3], 0
    %8 = vsyncpa [#allocation6], 0
    %9 = vsyncpa [#allocation4], 0
    // Predicated region
    $region2: #{tpu_custom_call.1} parent=1 // pred_check
      _
    $region3: #{tpu_custom_call.1} parent=1 // pred_check_branch
      %11 = sbr.rel (0) target = $region5
    $region4: #{tpu_custom_call.1} parent=1 // pred_region
      %13 = vsyncadd [#allocation3], 0
      %s15 = sshll.u32 %s0, 4
      %s16 = int_to_ptr.hbm [resolvable:$true] %s15
      %s17 = sshll.u32 [#allocation2], 4
      %s18 = int_to_ptr.vmem [resolvable:$true] %s17
      %20 = dma.hbm_to_vmem [thread:$0]  %s16, 256, %s18, [#allocation3]
    $region5: #{tpu_custom_call.1} parent=1 // pred_fallthru
      _
    // Predicated region
    $region6: #{tpu_custom_call.1} parent=1 // pred_check
      _
    $region7: #{tpu_custom_call.1} parent=1 // pred_check_branch
      %22 = sbr.rel (0) target = $region9
    $region8: #{tpu_custom_call.1} parent=1 // pred_region
      %24 = vsyncadd [#allocation6], 0
      %s26 = sshll.u32 %s1, 4
      %s27 = int_to_ptr.hbm [resolvable:$true] %s26
      %s28 = sshll.u32 [#allocation5], 4
      %s29 = int_to_ptr.vmem [resolvable:$true] %s28
      %31 = dma.hbm_to_vmem [thread:$0]  %s27, 256, %s29, [#allocation6]
    $region9: #{tpu_custom_call.1} parent=1 // pred_fallthru
      _
    // Predicated region
    $region10: #{tpu_custom_call.1} parent=1 // pred_check
      _
    $region11: #{tpu_custom_call.1} parent=1 // pred_check_branch
      %33 = sbr.rel (0) target = $region13
    $region12: #{tpu_custom_call.1} parent=1 // pred_region
      %35 = dma.done [#allocation3], 256
    $region13: #{tpu_custom_call.1} parent=1 // pred_fallthru
      _
    // Predicated region
    $region14: #{tpu_custom_call.1} parent=1 // pred_check
      _
    $region15: #{tpu_custom_call.1} parent=1 // pred_check_branch
      %37 = sbr.rel (0) target = $region17
    $region16: #{tpu_custom_call.1} parent=1 // pred_region
      %39 = dma.done [#allocation6], 256
    $region17: #{tpu_custom_call.1} parent=1 // pred_fallthru
      _
    %v40 = vld [vmem:[#allocation2] sm:$0xff]
    %v41 = vld [vmem:[#allocation2 + $0x8] sm:$0xff]
    %v42 = vld [vmem:[#allocation5] sm:$0xff]
    %v43 = vld [vmem:[#allocation5 + $0x8] sm:$0xff]
    %v44 = vmul.f32 %v40, %v42
    %v45 = vmul.f32 %v41, %v43
    %46 = vst [vmem:[#allocation7] sm:$0xff] %v44
    %47 = vst [vmem:[#allocation7 + $0x8] sm:$0xff] %v45
    // Predicated region
    $region18: #{tpu_custom_call.1} parent=1 // pred_check
      _
    $region19: #{tpu_custom_call.1} parent=1 // pred_check_branch
      %49 = sbr.rel (0) target = $region21
    $region20: #{tpu_custom_call.1} parent=1 // pred_region
      %51 = vsyncadd [#allocation4], 0
      %s53 = sshll.u32 [#allocation7], 4
      %s54 = int_to_ptr.vmem [resolvable:$true] %s53
      %s55 = sshll.u32 %s2, 4
      %s56 = int_to_ptr.hbm [resolvable:$true] %s55
      %58 = dma.vmem_to_hbm [thread:$0]  %s54, 256, %s56, [#allocation4]
    $region21: #{tpu_custom_call.1} parent=1 // pred_fallthru
      _
    // Predicated region
    $region22: #{tpu_custom_call.1} parent=1 // pred_check
      _
    $region23: #{tpu_custom_call.1} parent=1 // pred_check_branch
      %60 = sbr.rel (0) target = $region25
    $region24: #{tpu_custom_call.1} parent=1 // pred_region
      %62 = dma.done [#allocation4], 256
    $region25: #{tpu_custom_call.1} parent=1 // pred_fallthru
      _
    %63 = vsyncpa [#allocation3], 1
    %64 = vsyncpa [#allocation6], 1
    %65 = vsyncpa [#allocation4], 1

</llo_original>
